<compile_context>
chip_gen: v6e
topology: v6e:2x2x1
jax: 0.10.0
libtpu: 0.0.40
codegen_flags: <defaults>
</compile_context>

<pallas_src>
import jax
import jax.numpy as jnp
from jax.experimental import pallas as pl
from jax.experimental.pallas import tpu as pltpu

_LANES = 128
_SUBLANES = 8


def identity_kernel(x_ref, o_ref):
    # Single full-slab copy: one vector load + one unmasked lane-dense store.
    o_ref[...] = x_ref[...]


def none_seq_to_seq(x):
    """Pallas implementation of NoneSeqToSeq.forward (identity)."""
    orig_shape = x.shape
    orig_dtype = x.dtype

    # Flatten and pad to a lane-dense (rows, 128) slab with rows % 8 == 0 so
    # the block is vreg-aligned and the store is unmasked.
    flat = x.reshape(-1)
    n = flat.shape[0]
    tile = _SUBLANES * _LANES
    n_pad = ((n + tile - 1) // tile) * tile
    if n_pad != n:
        flat = jnp.pad(flat, (0, n_pad - n))
    slab = flat.reshape(n_pad // _LANES, _LANES)

    out_slab = pl.pallas_call(
        identity_kernel,
        out_shape=jax.ShapeDtypeStruct(slab.shape, orig_dtype),
        in_specs=[pl.BlockSpec(slab.shape, lambda: (0, 0))],
        out_specs=pl.BlockSpec(slab.shape, lambda: (0, 0)),
        compiler_params=pltpu.CompilerParams(
            # Plenty of headroom; slab is a few KB.
            vmem_limit_bytes=16 * 1024 * 1024,
        ),
    )(slab)

    return out_slab.reshape(-1)[:n].reshape(orig_shape)


if __name__ == "__main__":
    # Small seq-to-seq style input: (batch=2, seq=8, emb=32).
    B, T, E = 2, 8, 32
    key = jax.random.PRNGKey(0)
    x = jax.random.normal(key, (B, T, E), jnp.float32)

    out = none_seq_to_seq(x)
    out = jax.block_until_ready(out)

    # Reference: identity.
    assert out.shape == x.shape
    assert out.dtype == x.dtype
    assert jnp.array_equal(out, x), "mismatch vs identity reference"
    print("KERNEL_OK")
</pallas_src>

<mosaic_0001>
module attributes {stable_mosaic.version = 11 : i64} {
  func.func @identity_kernel(%arg0: memref<8x128xf32, #tpu.memory_space<vmem>>, %arg1: memref<8x128xf32, #tpu.memory_space<vmem>>) attributes {dimension_semantics = [], scalar_prefetch = 0 : i64, scratch_operands = 0 : i64, tpu.core_type = #tpu.core_type<tc>} {
    %c0 = arith.constant 0 : index
    %c0_0 = arith.constant 0 : index
    %0 = vector.load %arg0[%c0, %c0_0] : memref<8x128xf32, #tpu.memory_space<vmem>>, vector<8x128xf32>
    %c0_1 = arith.constant 0 : index
    %c0_2 = arith.constant 0 : index
    %1 = vector.load %arg1[%c0_1, %c0_2] : memref<8x128xf32, #tpu.memory_space<vmem>>, vector<8x128xf32>
    tpu.vector_store %arg1[%c0_1, %c0_2], %0 {strides = array<i32>} : memref<8x128xf32, #tpu.memory_space<vmem>>, vector<8x128xf32>,
    return
  }
}

</mosaic_0001>

<llo_original>
// kernel: tpu_custom_call.1
$region0: #{tpu_custom_call.1}
  #allocation0 [shape = 'u32[]', space=smem, size = 0x4, offset = 0x4, fixed_abs, tag = 'smem constant byte address 0x4 - core index']
  #allocation1 [shape = 'u32[144,128]{1,0:T(1,128)}', space=vmem, size = 0x12000, scoped, tag = 'internal scratch']
  %s0 = inlined_call_operand.hbm [shape: f32[8,128], index: 0, kind: input, shape index: {}]
  %s1 = inlined_call_operand.hbm [shape: f32[8,128], index: 1, kind: output, shape index: {}]
  %s2 = sld [smem:[#allocation0]]
  $region18: #{tpu_custom_call.1} parent=0
    _
  %s4 = ssub.s32 1, %s2
  %s5 = scalar_select 0, %s4, %s2
  $region1: #{tpu_custom_call.1} parent=0
    #allocation2 [shape = 'u8[4096]{0}', space=vmem, size = 0x1000, scoped, tag = 'input window, operand 0, single buffered']
    #allocation3 [shape = 's32[1]{0}', space=sflag, size = 0x4, scoped, tag = 'scoped memory for tpu_custom_call.1']
    #allocation4 [shape = 's32[1]{0}', space=sflag, size = 0x4, scoped, tag = 'scoped memory for tpu_custom_call.1']
    #allocation5 [shape = 'u8[4096]{0}', space=vmem, size = 0x1000, scoped, tag = 'output window, operand 0, single buffered']
    %6 = vsyncpa [#allocation3], 0
    %7 = vsyncpa [#allocation4], 0
    // Predicated region
    $region2: #{tpu_custom_call.1} parent=1 // pred_check
      _
    $region3: #{tpu_custom_call.1} parent=1 // pred_check_branch
      %9 = sbr.rel (0) target = $region5
    $region4: #{tpu_custom_call.1} parent=1 // pred_region
      %s11 = ssub.s32 128, 128
      %12 = vsyncadd [#allocation3], %s11
      %s14 = sshll.u32 [#allocation2], 4
      %s15 = int_to_ptr.vmem [resolvable:$true] %s14
      %17 = dma.hbm_to_vmem [thread:$0]  %s0, 128, %s15, [#allocation3]
    $region5: #{tpu_custom_call.1} parent=1 // pred_fallthru
      _
    // Predicated region
    $region6: #{tpu_custom_call.1} parent=1 // pred_check
      _
    $region7: #{tpu_custom_call.1} parent=1 // pred_check_branch
      %19 = sbr.rel (0) target = $region9
    $region8: #{tpu_custom_call.1} parent=1 // pred_region
      %20 = dma.done [#allocation3], 128
    $region9: #{tpu_custom_call.1} parent=1 // pred_fallthru
      _
    %v21 = vld [vmem:[#allocation2] sm:$0xff]
    %22 = vst [vmem:[#allocation5] sm:$0xff] %v21
    // Predicated region
    $region10: #{tpu_custom_call.1} parent=1 // pred_check
      _
    $region11: #{tpu_custom_call.1} parent=1 // pred_check_branch
      %24 = sbr.rel (0) target = $region13
    $region12: #{tpu_custom_call.1} parent=1 // pred_region
      %s26 = ssub.s32 128, 128
      %27 = vsyncadd [#allocation4], %s26
      %s29 = sshll.u32 [#allocation5], 4
      %s30 = int_to_ptr.vmem [resolvable:$true] %s29
      %32 = dma.vmem_to_hbm [thread:$0]  %s30, 128, %s1, [#allocation4]
    $region13: #{tpu_custom_call.1} parent=1 // pred_fallthru
      _
    // Predicated region
    $region14: #{tpu_custom_call.1} parent=1 // pred_check
      _
    $region15: #{tpu_custom_call.1} parent=1 // pred_check_branch
      %34 = sbr.rel (0) target = $region17
    $region16: #{tpu_custom_call.1} parent=1 // pred_region
      %35 = dma.done [#allocation4], 128
    $region17: #{tpu_custom_call.1} parent=1 // pred_fallthru
      _
    %36 = vsyncpa [#allocation3], 1
    %37 = vsyncpa [#allocation4], 1

</llo_original>
